<compile_context>
chip_gen: v5e
topology: v5e:2x2
jax: 0.10.0
libtpu: 0.0.40
codegen_flags: <defaults>
</compile_context>

<pallas_src>
import functools

import jax
import jax.numpy as jnp
from jax.experimental import pallas as pl
from jax.experimental.pallas import tpu as pltpu


# ----------------------------------------------------------------------------
# Pallas kernel: in-kernel cluster loop (masked per-cluster matmul with SMEM
# empty-cluster skip) + f32 bias + LeakyReLU + residual add, one store.
# ----------------------------------------------------------------------------
def _can_res_kernel(cnt_ref, idx_ref, patches_ref, w_ref, bias_ref, xr_ref,
                    o_ref, acc_ref, *, kc):
    b = pl.program_id(0)          # batch    (parallel)
    p = pl.program_id(1)          # HW tile  (parallel)
    n_p = pl.num_programs(1)
    base = (b * n_p + p) * kc     # offset into flattened SMEM counts

    idx_row = idx_ref[0]          # (1, T) int32, lane-dense
    pat = patches_ref[0]          # (CKKp, T) bf16

    acc_ref[...] = jnp.zeros_like(acc_ref)

    # Statically-unrolled cluster loop (kc is a trace-time constant).  The
    # per-cluster masks partition the pixels, so select-replace is exact.
    for c in range(kc):
        @pl.when(cnt_ref[base + c] > 0)       # skip clusters empty in this tile
        def _(c=c):
            # (Cout, CKKp) @ (CKKp, T): bf16 on the MXU, f32 accumulation.
            y = jnp.dot(w_ref[0, c], pat,
                        preferred_element_type=jnp.float32)       # (Cout, T)
            acc_ref[...] = jnp.where(idx_row == c, y, acc_ref[...])

    r = acc_ref[...] + bias_ref[...]            # exact f32 bias add
    r = jnp.where(r >= 0, r, 0.01 * r)          # LeakyReLU(0.01)
    o_ref[0] = xr_ref[0] + r                    # residual add (f32), single store


def _pick_hw_tile(hw, ckkp, cout, kc, max_tile=4096, budget_bytes=40 << 20):
    """Largest multiple-of-128 tile <= max_tile whose working set fits the
    VMEM budget (double-buffered inputs/outputs + resident weight slab)."""
    hw128 = ((hw + 127) // 128) * 128
    fixed = 2 * kc * cout * ckkp * 2 + 2 * cout * 4      # weight slab + bias

    def per_tile(t):
        return (2 * ckkp * t * 2        # patches (bf16, 2 bufs)
                + 2 * t * 4             # idx     (int32, 2 bufs)
                + 2 * cout * t * 4      # residual (f32, 2 bufs)
                + 2 * cout * t * 4      # out      (f32, 2 bufs)
                + cout * t * 4)         # acc scratch

    t = min(max_tile, hw128)
    t = max((t // 128) * 128, 128)
    while t > 128 and fixed + per_tile(t) > budget_bytes:
        t -= 128
    return t


def can_res_pallas(patches_cm, idx, weights_cm, bias, residual_cm, *,
                   max_hw_tile=4096):
    """patches_cm (B,CKK,HW) f32, idx (B,HW) int, weights_cm (B,Kc,Cout,CKK)
    f32, bias (Cout,) f32, residual_cm (B,Cout,HW) f32 -> (B,Cout,HW) f32."""
    B, CKK, HW = patches_cm.shape
    _, Kc, Cout, _ = weights_cm.shape

    CKKp = ((CKK + 7) // 8) * 8
    T = _pick_hw_tile(HW, CKKp, Cout, Kc, max_hw_tile)
    HWp = ((HW + T - 1) // T) * T          # pad HW so T | HWp (lane-dense tiles)
    n_tiles = HWp // T
    pad_hw = HWp - HW
    pad_k = CKKp - CKK

    # bf16 MXU operands built cast-first then padded (no f32 zero-init temp).
    patches_bf = jnp.pad(patches_cm.astype(jnp.bfloat16),
                         ((0, 0), (0, pad_k), (0, pad_hw)))
    weights_bf = jnp.pad(weights_cm.astype(jnp.bfloat16),
                         ((0, 0), (0, 0), (0, 0), (0, pad_k)))
    # Residual kept f32 to preserve the skip connection exactly.
    residual_f32 = jnp.pad(residual_cm.astype(jnp.float32),
                           ((0, 0), (0, 0), (0, pad_hw)))
    idx_p = jnp.pad(idx.astype(jnp.int32), ((0, 0), (0, pad_hw)))
    idx3 = idx_p.reshape(B, 1, HWp)                      # HW on lanes
    bias2 = bias.astype(jnp.float32).reshape(Cout, 1)

    # Per-(batch, hw-tile, cluster) pixel counts -> SMEM (flattened 1-D).
    counts = jnp.sum(
        (idx_p.reshape(B, n_tiles, T)[..., None]
         == jnp.arange(Kc, dtype=jnp.int32)).astype(jnp.int32),
        axis=2).reshape(-1)                              # (B * n_tiles * Kc,)

    out = pl.pallas_call(
        functools.partial(_can_res_kernel, kc=Kc),
        out_shape=jax.ShapeDtypeStruct((B, Cout, HWp), jnp.float32),
        grid_spec=pltpu.PrefetchScalarGridSpec(
            num_scalar_prefetch=1,
            # b outermost so the resident weight slab is only re-fetched when
            # b changes; both axes parallel (megacore / 2 TCs on v7x).
            grid=(B, n_tiles),
            in_specs=[
                pl.BlockSpec((1, 1, T), lambda b, p, cnt: (b, 0, p)),      # idx
                pl.BlockSpec((1, CKKp, T), lambda b, p, cnt: (b, 0, p)),   # patches
                pl.BlockSpec((1, Kc, Cout, CKKp),
                             lambda b, p, cnt: (b, 0, 0, 0)),              # weights (resident)
                pl.BlockSpec((Cout, 1), lambda b, p, cnt: (0, 0)),         # bias
                pl.BlockSpec((1, Cout, T), lambda b, p, cnt: (b, 0, p)),   # residual
            ],
            out_specs=pl.BlockSpec((1, Cout, T), lambda b, p, cnt: (b, 0, p)),
            scratch_shapes=[pltpu.VMEM((Cout, T), jnp.float32)],
        ),
        compiler_params=pltpu.CompilerParams(
            dimension_semantics=("parallel", "parallel"),
            vmem_limit_bytes=48 << 20),      # safe on v7x (64 MiB physical)
    )(counts, idx3, patches_bf, weights_bf, bias2, residual_f32)

    return out[:, :, :HW]


# ----------------------------------------------------------------------------
# Plain-JAX glue: im2col, KMeans (cluster_source='channel'), kernel generation
# ----------------------------------------------------------------------------
def im2col(x_nchw, k=3):
    """F.unfold-ordered patches, channel-major: (B, C*k*k, H*W)."""
    B, C, H, W = x_nchw.shape
    p = k // 2
    xp = jnp.pad(x_nchw, ((0, 0), (0, 0), (p, p), (p, p)))
    cols = []
    for di in range(k):
        for dj in range(k):
            cols.append(xp[:, :, di:di + H, dj:dj + W])
    pat = jnp.stack(cols, axis=2)                 # (B, C, k*k, H, W)
    return pat.reshape(B, C * k * k, H * W)       # (B, C*k*k, HW)


def kmeans(features, k, iters=10):
    """features (N, D) -> (assignments (N,), inertia scalar). Deterministic init."""
    n, _ = features.shape
    init_idx = jnp.linspace(0, n - 1, k).astype(jnp.int32)
    centroids = features[init_idx]

    def step(c, _):
        d2 = jnp.sum((features[:, None, :] - c[None, :, :]) ** 2, axis=-1)
        assign = jnp.argmin(d2, axis=-1)
        onehot = jax.nn.one_hot(assign, k, dtype=features.dtype)
        sums = onehot.T @ features
        counts = onehot.sum(0)[:, None]
        new_c = jnp.where(counts > 0, sums / jnp.maximum(counts, 1.0), c)
        return new_c, None

    centroids, _ = jax.lax.scan(step, centroids, None, length=iters)
    d2 = jnp.sum((features[:, None, :] - centroids[None, :, :]) ** 2, axis=-1)
    assign = jnp.argmin(d2, axis=-1).astype(jnp.int32)
    loss = jnp.mean(jnp.min(d2, axis=-1))
    return assign, loss


def init_params(key, channels, k=3):
    ckk = channels * k * k
    k1, k2, k3 = jax.random.split(key, 3)
    return {
        "W0": jax.random.normal(k1, (ckk, channels), jnp.float32) / jnp.sqrt(ckk),
        "Wg": jax.random.normal(k2, (ckk, ckk), jnp.float32) / jnp.sqrt(ckk),
        "bg": jnp.zeros((ckk,), jnp.float32),
        "bias": jax.random.normal(k3, (channels,), jnp.float32) * 0.01,
    }


@functools.partial(jax.jit, static_argnames=("cluster_num",))
def can_res_block_forward(params, x, cluster_num):
    """CANResBlock.forward: (x + LeakyReLU(CANConv(x)), idx, cluster_loss)."""
    B, C, H, W = x.shape
    HW = H * W
    patches_cm = im2col(x, 3).astype(jnp.float32)        # (B, C*9, HW)
    feats_cm = x.reshape(B, C, HW).astype(jnp.float32)   # channel-major residual
    pix_feats = feats_cm.transpose(0, 2, 1)              # (B, HW, C)

    # clustering on per-pixel channel features (cluster_source='channel')
    idx, losses = jax.vmap(lambda f: kmeans(f, cluster_num))(pix_feats)
    cluster_loss = jnp.mean(losses)

    # content-adaptive kernel generation from per-cluster mean patches
    onehot = jax.nn.one_hot(idx, cluster_num, dtype=jnp.float32)   # (B, HW, Kc)
    sums = jnp.einsum("bpk,bdp->bkd", onehot, patches_cm)
    counts = jnp.maximum(onehot.sum(axis=1), 1.0)[..., None]
    cluster_mean = sums / counts                                   # (B, Kc, CKK)
    mod = jax.nn.sigmoid(cluster_mean @ params["Wg"] + params["bg"])
    weights_cm = jnp.einsum("bkd,do->bkod", mod, params["W0"])     # (B, Kc, C, CKK)

    # hot path: fused per-cluster matmul + bias + LeakyReLU + residual (Pallas)
    out_cm = can_res_pallas(patches_cm, idx, weights_cm, params["bias"], feats_cm)
    out = out_cm.reshape(B, C, H, W)
    return out, idx, cluster_loss


if __name__ == "__main__":
    B, C, H, W = 2, 4, 16, 16
    cluster_num = 4

    key = jax.random.PRNGKey(0)
    kp, kx = jax.random.split(key)
    params = init_params(kp, C)
    x = jax.random.normal(kx, (B, C, H, W), jnp.float32)

    out, idx, cluster_loss = can_res_block_forward(params, x, cluster_num)
    jax.block_until_ready(out)
    jax.block_until_ready(idx)
    jax.block_until_ready(cluster_loss)

    # correctness check against a pure-JAX f32 reference
    HW = H * W
    patches_cm = im2col(x, 3)
    feats_cm = x.reshape(B, C, HW)
    onehot = jax.nn.one_hot(idx, cluster_num, dtype=jnp.float32)
    sums = jnp.einsum("bpk,bdp->bkd", onehot, patches_cm)
    counts = jnp.maximum(onehot.sum(axis=1), 1.0)[..., None]
    cluster_mean = sums / counts
    mod = jax.nn.sigmoid(cluster_mean @ params["Wg"] + params["bg"])
    weights_cm = jnp.einsum("bkd,do->bkod", mod, params["W0"])
    conv = jnp.einsum("bdp,bpk,bkod->bop", patches_cm, onehot, weights_cm,
                      precision=jax.lax.Precision.HIGHEST)
    res = conv + params["bias"][None, :, None]
    res = jnp.where(res >= 0, res, 0.01 * res)
    out_ref = (feats_cm + res).reshape(B, C, H, W)
    assert jnp.allclose(out, out_ref, rtol=5e-2, atol=5e-2), "mismatch vs reference"

    print("KERNEL_OK")
</pallas_src>

<mosaic_0001>
module attributes {stable_mosaic.version = 11 : i64} {
  func.func @_can_res_kernel(%arg0: i32, %arg1: i32, %arg2: memref<8xi32, #tpu.memory_space<smem>>, %arg3: memref<1x1x256xi32, #tpu.memory_space<vmem>>, %arg4: memref<1x40x256xbf16, #tpu.memory_space<vmem>>, %arg5: memref<1x4x4x40xbf16, #tpu.memory_space<vmem>>, %arg6: memref<4x1xf32, #tpu.memory_space<vmem>>, %arg7: memref<1x4x256xf32, #tpu.memory_space<vmem>>, %arg8: memref<1x4x256xf32, #tpu.memory_space<vmem>>, %arg9: memref<4x256xf32, #tpu.memory_space<vmem>>) attributes {dimension_semantics = [#tpu.dimension_semantics<parallel>, #tpu.dimension_semantics<parallel>], iteration_bounds = array<i64: 2, 1>, scalar_prefetch = 1 : i64, scratch_operands = 1 : i64, tpu.core_type = #tpu.core_type<tc>, window_params = [{transform_indices = @transform_0, window_bounds = array<i64: 1, 1, 256>}, {transform_indices = @transform_1, window_bounds = array<i64: 1, 40, 256>}, {transform_indices = @transform_2, window_bounds = array<i64: 1, 4, 4, 40>}, {pipeline_mode = #tpu.pipeline_mode<synchronous>, transform_indices = @transform_3, window_bounds = array<i64: 4, 1>}, {transform_indices = @transform_4, window_bounds = array<i64: 1, 4, 256>}, {transform_indices = @transform_5, window_bounds = array<i64: 1, 4, 256>}]} {
    %c1_i32 = arith.constant 1 : i32
    %0 = arith.muli %arg0, %c1_i32 : i32
    %1 = arith.addi %0, %arg1 : i32
    %c4_i32 = arith.constant 4 : i32
    %2 = arith.muli %1, %c4_i32 : i32
    %c0 = arith.constant 0 : index
    %c0_0 = arith.constant 0 : index
    %c0_1 = arith.constant 0 : index
    %3 = vector.load %arg3[%c0, %c0_0, %c0_1] : memref<1x1x256xi32, #tpu.memory_space<vmem>>, vector<1x1x256xi32>
    %4 = vector.shape_cast %3 : vector<1x1x256xi32> to vector<1x256xi32>
    %c0_2 = arith.constant 0 : index
    %c0_3 = arith.constant 0 : index
    %c0_4 = arith.constant 0 : index
    %5 = vector.load %arg4[%c0_2, %c0_3, %c0_4] : memref<1x40x256xbf16, #tpu.memory_space<vmem>>, vector<1x40x256xbf16>
    %6 = vector.shape_cast %5 : vector<1x40x256xbf16> to vector<40x256xbf16>
    %cst = arith.constant 0.000000e+00 : f32
    %7 = vector.broadcast %cst : f32 to vector<4x256xf32>
    %c0_5 = arith.constant 0 : index
    %c0_6 = arith.constant 0 : index
    %8 = vector.load %arg9[%c0_5, %c0_6] : memref<4x256xf32, #tpu.memory_space<vmem>>, vector<4x256xf32>
    tpu.vector_store %arg9[%c0_5, %c0_6], %7 {strides = array<i32>} : memref<4x256xf32, #tpu.memory_space<vmem>>, vector<4x256xf32>,
    %c0_i32 = arith.constant 0 : i32
    %9 = arith.addi %2, %c0_i32 : i32
    %10 = arith.index_cast %9 : i32 to index
    %11 = memref.load %arg2[%10] : memref<8xi32, #tpu.memory_space<smem>>
    %c0_i32_7 = arith.constant 0 : i32
    %12 = arith.cmpi sgt, %11, %c0_i32_7 : i32
    %13 = arith.extui %12 : i1 to i32
    %c0_i32_8 = arith.constant 0 : i32
    %14 = arith.cmpi ne, %13, %c0_i32_8 : i32
    scf.if %14 {
      %c0_28 = arith.constant 0 : index
      %c0_29 = arith.constant 0 : index
      %c0_30 = arith.constant 0 : index
      %c0_31 = arith.constant 0 : index
      %48 = vector.load %arg5[%c0_28, %c0_29, %c0_30, %c0_31] : memref<1x4x4x40xbf16, #tpu.memory_space<vmem>>, vector<1x1x4x40xbf16>
      %49 = vector.shape_cast %48 : vector<1x1x4x40xbf16> to vector<4x40xbf16>
      %cst_32 = arith.constant dense<0.000000e+00> : vector<4x256xf32>
      %50 = tpu.matmul %49, %6, %cst_32 {dimension_numbers = #tpu.dot_dimension_numbers<[1], [0], [0], [1], [0, 0, 1, 1], [], []>} : vector<4x40xbf16>, vector<40x256xbf16>, vector<4x256xf32> -> vector<4x256xf32>
      %c0_i32_33 = arith.constant 0 : i32
      %51 = vector.broadcast %c0_i32_33 : i32 to vector<1x256xi32>
      %52 = arith.cmpi eq, %4, %51 : vector<1x256xi32>
      %c0_34 = arith.constant 0 : index
      %c0_35 = arith.constant 0 : index
      %53 = vector.load %arg9[%c0_34, %c0_35] : memref<4x256xf32, #tpu.memory_space<vmem>>, vector<4x256xf32>
      %54 = vector.shape_cast %52 : vector<1x256xi1> to vector<1x256xi1>
      %55 = vector.broadcast %54 : vector<1x256xi1> to vector<4x256xi1>
      %56 = arith.select %55, %50, %53 : vector<4x256xi1>, vector<4x256xf32>
      %c0_36 = arith.constant 0 : index
      %c0_37 = arith.constant 0 : index
      %57 = vector.load %arg9[%c0_36, %c0_37] : memref<4x256xf32, #tpu.memory_space<vmem>>, vector<4x256xf32>
      tpu.vector_store %arg9[%c0_36, %c0_37], %56 {strides = array<i32>} : memref<4x256xf32, #tpu.memory_space<vmem>>, vector<4x256xf32>,
    } else {
    }
    %c1_i32_9 = arith.constant 1 : i32
    %15 = arith.addi %2, %c1_i32_9 : i32
    %16 = arith.index_cast %15 : i32 to index
    %17 = memref.load %arg2[%16] : memref<8xi32, #tpu.memory_space<smem>>
    %c0_i32_10 = arith.constant 0 : i32
    %18 = arith.cmpi sgt, %17, %c0_i32_10 : i32
    %19 = arith.extui %18 : i1 to i32
    %c0_i32_11 = arith.constant 0 : i32
    %20 = arith.cmpi ne, %19, %c0_i32_11 : i32
    scf.if %20 {
      %c0_28 = arith.constant 0 : index
      %c1 = arith.constant 1 : index
      %c0_29 = arith.constant 0 : index
      %c0_30 = arith.constant 0 : index
      %48 = vector.load %arg5[%c0_28, %c1, %c0_29, %c0_30] : memref<1x4x4x40xbf16, #tpu.memory_space<vmem>>, vector<1x1x4x40xbf16>
      %49 = vector.shape_cast %48 : vector<1x1x4x40xbf16> to vector<4x40xbf16>
      %cst_31 = arith.constant dense<0.000000e+00> : vector<4x256xf32>
      %50 = tpu.matmul %49, %6, %cst_31 {dimension_numbers = #tpu.dot_dimension_numbers<[1], [0], [0], [1], [0, 0, 1, 1], [], []>} : vector<4x40xbf16>, vector<40x256xbf16>, vector<4x256xf32> -> vector<4x256xf32>
      %c1_i32_32 = arith.constant 1 : i32
      %51 = vector.broadcast %c1_i32_32 : i32 to vector<1x256xi32>
      %52 = arith.cmpi eq, %4, %51 : vector<1x256xi32>
      %c0_33 = arith.constant 0 : index
      %c0_34 = arith.constant 0 : index
      %53 = vector.load %arg9[%c0_33, %c0_34] : memref<4x256xf32, #tpu.memory_space<vmem>>, vector<4x256xf32>
      %54 = vector.shape_cast %52 : vector<1x256xi1> to vector<1x256xi1>
      %55 = vector.broadcast %54 : vector<1x256xi1> to vector<4x256xi1>
      %56 = arith.select %55, %50, %53 : vector<4x256xi1>, vector<4x256xf32>
      %c0_35 = arith.constant 0 : index
      %c0_36 = arith.constant 0 : index
      %57 = vector.load %arg9[%c0_35, %c0_36] : memref<4x256xf32, #tpu.memory_space<vmem>>, vector<4x256xf32>
      tpu.vector_store %arg9[%c0_35, %c0_36], %56 {strides = array<i32>} : memref<4x256xf32, #tpu.memory_space<vmem>>, vector<4x256xf32>,
    } else {
    }
    %c2_i32 = arith.constant 2 : i32
    %21 = arith.addi %2, %c2_i32 : i32
    %22 = arith.index_cast %21 : i32 to index
    %23 = memref.load %arg2[%22] : memref<8xi32, #tpu.memory_space<smem>>
    %c0_i32_12 = arith.constant 0 : i32
    %24 = arith.cmpi sgt, %23, %c0_i32_12 : i32
    %25 = arith.extui %24 : i1 to i32
    %c0_i32_13 = arith.constant 0 : i32
    %26 = arith.cmpi ne, %25, %c0_i32_13 : i32
    scf.if %26 {
      %c0_28 = arith.constant 0 : index
      %c2 = arith.constant 2 : index
      %c0_29 = arith.constant 0 : index
      %c0_30 = arith.constant 0 : index
      %48 = vector.load %arg5[%c0_28, %c2, %c0_29, %c0_30] : memref<1x4x4x40xbf16, #tpu.memory_space<vmem>>, vector<1x1x4x40xbf16>
      %49 = vector.shape_cast %48 : vector<1x1x4x40xbf16> to vector<4x40xbf16>
      %cst_31 = arith.constant dense<0.000000e+00> : vector<4x256xf32>
      %50 = tpu.matmul %49, %6, %cst_31 {dimension_numbers = #tpu.dot_dimension_numbers<[1], [0], [0], [1], [0, 0, 1, 1], [], []>} : vector<4x40xbf16>, vector<40x256xbf16>, vector<4x256xf32> -> vector<4x256xf32>
      %c2_i32_32 = arith.constant 2 : i32
      %51 = vector.broadcast %c2_i32_32 : i32 to vector<1x256xi32>
      %52 = arith.cmpi eq, %4, %51 : vector<1x256xi32>
      %c0_33 = arith.constant 0 : index
      %c0_34 = arith.constant 0 : index
      %53 = vector.load %arg9[%c0_33, %c0_34] : memref<4x256xf32, #tpu.memory_space<vmem>>, vector<4x256xf32>
      %54 = vector.shape_cast %52 : vector<1x256xi1> to vector<1x256xi1>
      %55 = vector.broadcast %54 : vector<1x256xi1> to vector<4x256xi1>
      %56 = arith.select %55, %50, %53 : vector<4x256xi1>, vector<4x256xf32>
      %c0_35 = arith.constant 0 : index
      %c0_36 = arith.constant 0 : index
      %57 = vector.load %arg9[%c0_35, %c0_36] : memref<4x256xf32, #tpu.memory_space<vmem>>, vector<4x256xf32>
      tpu.vector_store %arg9[%c0_35, %c0_36], %56 {strides = array<i32>} : memref<4x256xf32, #tpu.memory_space<vmem>>, vector<4x256xf32>,
    } else {
    }
    %c3_i32 = arith.constant 3 : i32
    %27 = arith.addi %2, %c3_i32 : i32
    %28 = arith.index_cast %27 : i32 to index
    %29 = memref.load %arg2[%28] : memref<8xi32, #tpu.memory_space<smem>>
    %c0_i32_14 = arith.constant 0 : i32
    %30 = arith.cmpi sgt, %29, %c0_i32_14 : i32
    %31 = arith.extui %30 : i1 to i32
    %c0_i32_15 = arith.constant 0 : i32
    %32 = arith.cmpi ne, %31, %c0_i32_15 : i32
    scf.if %32 {
      %c0_28 = arith.constant 0 : index
      %c3 = arith.constant 3 : index
      %c0_29 = arith.constant 0 : index
      %c0_30 = arith.constant 0 : index
      %48 = vector.load %arg5[%c0_28, %c3, %c0_29, %c0_30] : memref<1x4x4x40xbf16, #tpu.memory_space<vmem>>, vector<1x1x4x40xbf16>
      %49 = vector.shape_cast %48 : vector<1x1x4x40xbf16> to vector<4x40xbf16>
      %cst_31 = arith.constant dense<0.000000e+00> : vector<4x256xf32>
      %50 = tpu.matmul %49, %6, %cst_31 {dimension_numbers = #tpu.dot_dimension_numbers<[1], [0], [0], [1], [0, 0, 1, 1], [], []>} : vector<4x40xbf16>, vector<40x256xbf16>, vector<4x256xf32> -> vector<4x256xf32>
      %c3_i32_32 = arith.constant 3 : i32
      %51 = vector.broadcast %c3_i32_32 : i32 to vector<1x256xi32>
      %52 = arith.cmpi eq, %4, %51 : vector<1x256xi32>
      %c0_33 = arith.constant 0 : index
      %c0_34 = arith.constant 0 : index
      %53 = vector.load %arg9[%c0_33, %c0_34] : memref<4x256xf32, #tpu.memory_space<vmem>>, vector<4x256xf32>
      %54 = vector.shape_cast %52 : vector<1x256xi1> to vector<1x256xi1>
      %55 = vector.broadcast %54 : vector<1x256xi1> to vector<4x256xi1>
      %56 = arith.select %55, %50, %53 : vector<4x256xi1>, vector<4x256xf32>
      %c0_35 = arith.constant 0 : index
      %c0_36 = arith.constant 0 : index
      %57 = vector.load %arg9[%c0_35, %c0_36] : memref<4x256xf32, #tpu.memory_space<vmem>>, vector<4x256xf32>
      tpu.vector_store %arg9[%c0_35, %c0_36], %56 {strides = array<i32>} : memref<4x256xf32, #tpu.memory_space<vmem>>, vector<4x256xf32>,
    } else {
    }
    %c0_16 = arith.constant 0 : index
    %c0_17 = arith.constant 0 : index
    %33 = vector.load %arg9[%c0_16, %c0_17] : memref<4x256xf32, #tpu.memory_space<vmem>>, vector<4x256xf32>
    %c0_18 = arith.constant 0 : index
    %c0_19 = arith.constant 0 : index
    %34 = vector.load %arg6[%c0_18, %c0_19] : memref<4x1xf32, #tpu.memory_space<vmem>>, vector<4x1xf32>
    %35 = vector.broadcast %34 : vector<4x1xf32> to vector<4x256xf32>
    %36 = arith.addf %33, %35 : vector<4x256xf32>
    %cst_20 = arith.constant 0.000000e+00 : f32
    %37 = vector.broadcast %cst_20 : f32 to vector<4x256xf32>
    %38 = arith.cmpf oge, %36, %37 : vector<4x256xf32>
    %cst_21 = arith.constant 0.00999999977 : f32
    %39 = vector.broadcast %cst_21 : f32 to vector<4x256xf32>
    %40 = arith.mulf %39, %36 : vector<4x256xf32>
    %41 = arith.select %38, %36, %40 : vector<4x256xi1>, vector<4x256xf32>
    %c0_22 = arith.constant 0 : index
    %c0_23 = arith.constant 0 : index
    %c0_24 = arith.constant 0 : index
    %42 = vector.load %arg7[%c0_22, %c0_23, %c0_24] : memref<1x4x256xf32, #tpu.memory_space<vmem>>, vector<1x4x256xf32>
    %43 = vector.shape_cast %42 : vector<1x4x256xf32> to vector<4x256xf32>
    %44 = arith.addf %43, %41 : vector<4x256xf32>
    %c0_25 = arith.constant 0 : index
    %c0_26 = arith.constant 0 : index
    %c0_27 = arith.constant 0 : index
    %45 = vector.load %arg8[%c0_25, %c0_26, %c0_27] : memref<1x4x256xf32, #tpu.memory_space<vmem>>, vector<1x4x256xf32>
    %46 = vector.shape_cast %45 : vector<1x4x256xf32> to vector<4x256xf32>
    %47 = vector.shape_cast %44 : vector<4x256xf32> to vector<1x4x256xf32>
    tpu.vector_store %arg8[%c0_25, %c0_26, %c0_27], %47 {strides = array<i32>} : memref<1x4x256xf32, #tpu.memory_space<vmem>>, vector<1x4x256xf32>,
    return
  }
  func.func @transform_0(%arg0: i32, %arg1: i32, %arg2: memref<8xi32, #tpu.memory_space<smem>>) -> (i32, i32, i32) {
    %c0_i32 = arith.constant 0 : i32
    %c0_i32_0 = arith.constant 0 : i32
    return %arg0, %c0_i32, %arg1 : i32, i32, i32
  }
  func.func @transform_1(%arg0: i32, %arg1: i32, %arg2: memref<8xi32, #tpu.memory_space<smem>>) -> (i32, i32, i32) {
    %c0_i32 = arith.constant 0 : i32
    %c0_i32_0 = arith.constant 0 : i32
    return %arg0, %c0_i32, %arg1 : i32, i32, i32
  }
  func.func @transform_2(%arg0: i32, %arg1: i32, %arg2: memref<8xi32, #tpu.memory_space<smem>>) -> (i32, i32, i32, i32) {
    %c0_i32 = arith.constant 0 : i32
    %c0_i32_0 = arith.constant 0 : i32
    %c0_i32_1 = arith.constant 0 : i32
    %c0_i32_2 = arith.constant 0 : i32
    return %arg0, %c0_i32, %c0_i32_0, %c0_i32_1 : i32, i32, i32, i32
  }
  func.func @transform_3(%arg0: i32, %arg1: i32, %arg2: memref<8xi32, #tpu.memory_space<smem>>) -> (i32, i32) {
    %c0_i32 = arith.constant 0 : i32
    %c0_i32_0 = arith.constant 0 : i32
    %c0_i32_1 = arith.constant 0 : i32
    return %c0_i32, %c0_i32_0 : i32, i32
  }
  func.func @transform_4(%arg0: i32, %arg1: i32, %arg2: memref<8xi32, #tpu.memory_space<smem>>) -> (i32, i32, i32) {
    %c0_i32 = arith.constant 0 : i32
    %c0_i32_0 = arith.constant 0 : i32
    return %arg0, %c0_i32, %arg1 : i32, i32, i32
  }
  func.func @transform_5(%arg0: i32, %arg1: i32, %arg2: memref<8xi32, #tpu.memory_space<smem>>) -> (i32, i32, i32) {
    %c0_i32 = arith.constant 0 : i32
    %c0_i32_0 = arith.constant 0 : i32
    return %arg0, %c0_i32, %arg1 : i32, i32, i32
  }
}

</mosaic_0001>

<llo_original>
// kernel: can_res_block_forward.1
$region0: #{can_res_block_forward.1}
  #allocation0 [shape = 'u32[]', space=smem, size = 0x4, offset = 0x4, fixed_abs, tag = 'smem constant byte address 0x4 - core index']
  #allocation1 [shape = 'u32[72,128]{1,0:T(1,128)}', space=vmem, size = 0x9000, scoped, tag = 'internal scratch']
  #allocation2 [shape = 'f32[4,256]{1,0:T(4,128)}', space=vmem, size = 0x1000, scoped, tag = 'scratch operand']
  #allocation3 [shape = 's32[1]{0}', space=sflag, size = 0x4, scoped, tag = 'scoped memory for can_res_block_forward.1']
  #allocation4 [shape = 'u8[512]{0}', space=smem, size = 0x200, scoped, tag = 'prefetched SMEM operand 0']
  %s0 = inlined_call_operand.vmem [shape: s32[8], index: 0, kind: input, shape index: {}]
  %s1 = inlined_call_operand.vmem [shape: s32[2,1,256], index: 1, kind: input, shape index: {}]
  %s2 = inlined_call_operand.vmem [shape: bf16[2,40,256], index: 2, kind: input, shape index: {}]
  %s3 = inlined_call_operand.vmem [shape: bf16[2,4,4,40], index: 3, kind: input, shape index: {}]
  %s4 = inlined_call_operand.vmem [shape: f32[4,1], index: 4, kind: input, shape index: {}]
  %s5 = inlined_call_operand.vmem [shape: f32[2,4,256], index: 5, kind: input, shape index: {}]
  %s6 = inlined_call_operand.vmem [shape: f32[2,4,256], index: 6, kind: output, shape index: {}]
  %s7 = sld [smem:[#allocation0]]
  $region69: #{can_res_block_forward.1} parent=0
    _
  %s9 = ssub.s32 1, %s7
  %s10 = scalar_select 0, %s9, %s7
  %s12 = sshll.u32 %s0, 4
  %s13 = int_to_ptr.vmem [resolvable:$true] %s12
  %15 = dma.vmem_to_smem %s13, 16, [#allocation4], [#allocation3]
  %17 = dma.done [#allocation3], 16
  %18 = sfence
  loop: start=0, step=1, limit=4
  $region2: #{can_res_block_forward.1} parent=0 // loop_pre_header
    _
  $region3: #{can_res_block_forward.1} parent=0 // loop_header
    %s20 = sphi 0, %s24
    %p21 = scmp.ge.s32.totalorder %s20, 4
    %s27 = sphi 0, %s39
    %s28 = sphi 0, %s35
    %s29 = sphi 0, %s27
    %s30 = sphi 0, %s28
    %s31 = sphi 0, %s29
    %s32 = sphi 0, %s30
    %s44 = sphi 0, %s46
    %s47 = sphi 0, %s44
    %s48 = sphi 0, %s47
    %s64 = sphi 0, %s48
    %s72 = sphi 0, %s74
    %s75 = sphi 0, %s72
    %s76 = sphi 0, %s75
    %s92 = sphi 0, %s76
    %s98 = sphi 0, %s100
    %s101 = sphi 0, %s98
    %s102 = sphi 0, %s101
    %s118 = sphi 0, %s102
    %s122 = sphi 0, %s122
    %s124 = sphi 0, %s122
    %s125 = sphi 0, %s124
    %s139 = sphi 0, %s125
    %s147 = sphi 0, %s149
    %s150 = sphi 0, %s147
    %s151 = sphi 0, %s150
    %s167 = sphi 0, %s151
    %s175 = sphi 0, %s177
    %s178 = sphi 0, %s175
    %s179 = sphi 0, %s178
    %s195 = sphi 0, %s179
  $region4: #{can_res_block_forward.1} parent=0 // loop_header_branch
    %23 = sbr.rel (%p21) target = $region8
  $region5: #{can_res_block_forward.1} parent=0 // loop_body
    %s25 = ssub.s32 %s20, 1
    %s26 = ssub.s32 %s20, 2
    %s33 = sadd.s32 1, %s28
    %p34 = scmp.ge.s32.totalorder %s33, 1
    %s35 = scalar_select %p34, 0, %s33
    %s36 = sadd.s32 1, %s27
    %s37 = scalar_select %p34, %s36, %s27
    %p38 = scmp.ge.s32.totalorder %s37, 2
    %s39 = scalar_select %p38, 0, %s37
    %s40 = ssub.s32 %s27, %s39
    %s41 = ssub.s32 %s28, %s35
    %s42 = sor.u32 %s40, %s41
    %p43 = scmp.eq.s32.totalorder %s42, 0
    %s45 = sadd.s32 %s44, 1
    %s46 = scalar_select %p43, %s44, %s45
    %p49 = pneg %p43
    %p50 = scmp.eq.s32.totalorder %s20, 1
    %p51 = por %p49, %p50
    %p52 = scmp.ne.s32.totalorder %s44, %s47
    %p53 = scmp.eq.s32.totalorder %s20, 0
    %p54 = por %p52, %p53
    %p55 = scmp.ne.s32.totalorder %s44, %s47
    %p56 = scmp.eq.s32.totalorder %s25, 1
    %p57 = por %p55, %p56
    %p58 = scmp.ne.s32.totalorder %s47, %s48
    %p59 = scmp.eq.s32.totalorder %s25, 0
    %p60 = por %p58, %p59
    %p61 = scmp.ne.s32.totalorder %s47, %s48
    %p62 = scmp.eq.s32.totalorder %s26, 1
    %p63 = por %p61, %p62
    %p65 = scmp.ne.s32.totalorder %s48, %s64
    %p66 = scmp.eq.s32.totalorder %s26, 0
    %p67 = por %p65, %p66
    %s68 = ssub.s32 %s27, %s39
    %s69 = ssub.s32 %s28, %s35
    %s70 = sor.u32 %s68, %s69
    %p71 = scmp.eq.s32.totalorder %s70, 0
    %s73 = sadd.s32 %s72, 1
    %s74 = scalar_select %p71, %s72, %s73
    %p77 = pneg %p71
    %p78 = scmp.eq.s32.totalorder %s20, 1
    %p79 = por %p77, %p78
    %p80 = scmp.ne.s32.totalorder %s72, %s75
    %p81 = scmp.eq.s32.totalorder %s20, 0
    %p82 = por %p80, %p81
    %p83 = scmp.ne.s32.totalorder %s72, %s75
    %p84 = scmp.eq.s32.totalorder %s25, 1
    %p85 = por %p83, %p84
    %p86 = scmp.ne.s32.totalorder %s75, %s76
    %p87 = scmp.eq.s32.totalorder %s25, 0
    %p88 = por %p86, %p87
    %p89 = scmp.ne.s32.totalorder %s75, %s76
    %p90 = scmp.eq.s32.totalorder %s26, 1
    %p91 = por %p89, %p90
    %p93 = scmp.ne.s32.totalorder %s76, %s92
    %p94 = scmp.eq.s32.totalorder %s26, 0
    %p95 = por %p93, %p94
    %s96 = ssub.s32 %s27, %s39
    %p97 = scmp.eq.s32.totalorder %s96, 0
    %s99 = sadd.s32 %s98, 1
    %s100 = scalar_select %p97, %s98, %s99
    %p103 = pneg %p97
    %p104 = scmp.eq.s32.totalorder %s20, 1
    %p105 = por %p103, %p104
    %p106 = scmp.ne.s32.totalorder %s98, %s101
    %p107 = scmp.eq.s32.totalorder %s20, 0
    %p108 = por %p106, %p107
    %p109 = scmp.ne.s32.totalorder %s98, %s101
    %p110 = scmp.eq.s32.totalorder %s25, 1
    %p111 = por %p109, %p110
    %p112 = scmp.ne.s32.totalorder %s101, %s102
    %p113 = scmp.eq.s32.totalorder %s25, 0
    %p114 = por %p112, %p113
    %p115 = scmp.ne.s32.totalorder %s101, %s102
    %p116 = scmp.eq.s32.totalorder %s26, 1
    %p117 = por %p115, %p116
    %p119 = scmp.ne.s32.totalorder %s102, %s118
    %p120 = scmp.eq.s32.totalorder %s26, 0
    %p121 = por %p119, %p120
    %s123 = sadd.s32 %s122, 1
    %p126 = scmp.eq.s32.totalorder %s20, 1
    %p127 = scmp.ne.s32.totalorder %s122, %s124
    %p128 = scmp.eq.s32.totalorder %s20, 0
    %p129 = por %p127, %p128
    %p130 = scmp.ne.s32.totalorder %s122, %s124
    %p131 = scmp.eq.s32.totalorder %s25, 1
    %p132 = por %p130, %p131
    %p133 = scmp.ne.s32.totalorder %s124, %s125
    %p134 = scmp.eq.s32.totalorder %s25, 0
    %p135 = por %p133, %p134
    %p136 = scmp.ne.s32.totalorder %s124, %s125
    %p137 = scmp.eq.s32.totalorder %s26, 1
    %p138 = por %p136, %p137
    %p140 = scmp.ne.s32.totalorder %s125, %s139
    %p141 = scmp.eq.s32.totalorder %s26, 0
    %p142 = por %p140, %p141
    %s143 = ssub.s32 %s27, %s39
    %s144 = ssub.s32 %s28, %s35
    %s145 = sor.u32 %s143, %s144
    %p146 = scmp.eq.s32.totalorder %s145, 0
    %s148 = sadd.s32 %s147, 1
    %s149 = scalar_select %p146, %s147, %s148
    %p152 = pneg %p146
    %p153 = scmp.eq.s32.totalorder %s20, 1
    %p154 = por %p152, %p153
    %p155 = scmp.ne.s32.totalorder %s147, %s150
    %p156 = scmp.eq.s32.totalorder %s20, 0
    %p157 = por %p155, %p156
    %p158 = scmp.ne.s32.totalorder %s147, %s150
    %p159 = scmp.eq.s32.totalorder %s25, 1
    %p160 = por %p158, %p159
    %p161 = scmp.ne.s32.totalorder %s150, %s151
    %p162 = scmp.eq.s32.totalorder %s25, 0
    %p163 = por %p161, %p162
    %p164 = scmp.ne.s32.totalorder %s150, %s151
    %p165 = scmp.eq.s32.totalorder %s26, 1
    %p166 = por %p164, %p165
    %p168 = scmp.ne.s32.totalorder %s151, %s167
    %p169 = scmp.eq.s32.totalorder %s26, 0
    %p170 = por %p168, %p169
    %s171 = ssub.s32 %s27, %s39
    %s172 = ssub.s32 %s28, %s35
    %s173 = sor.u32 %s171, %s172
    %p174 = scmp.eq.s32.totalorder %s173, 0
    %s176 = sadd.s32 %s175, 1
    %s177 = scalar_select %p174, %s175, %s176
    %p180 = pneg %p174
    %p181 = scmp.eq.s32.totalorder %s20, 1
    %p182 = por %p180, %p181
    %p183 = scmp.ne.s32.totalorder %s175, %s178
    %p184 = scmp.eq.s32.totalorder %s20, 0
    %p185 = por %p183, %p184
    %p186 = scmp.ne.s32.totalorder %s175, %s178
    %p187 = scmp.eq.s32.totalorder %s25, 1
    %p188 = por %p186, %p187
    %p189 = scmp.ne.s32.totalorder %s178, %s179
    %p190 = scmp.eq.s32.totalorder %s25, 0
    %p191 = por %p189, %p190
    %p192 = scmp.ne.s32.totalorder %s178, %s179
    %p193 = scmp.eq.s32.totalorder %s26, 1
    %p194 = por %p192, %p193
    %p196 = scmp.ne.s32.totalorder %s179, %s195
    %p197 = scmp.eq.s32.totalorder %s26, 0
    %p198 = por %p196, %p197
    %p199 = scmp.le.s32.totalorder 1, %s20
    %p200 = scmp.lt.s32.totalorder %s20, 3
    %p201 = pnand %p199, %p200
    %p202 = pneg %p201
    // Predicated region
    $region9: #{can_res_block_forward.1} parent=5 // pred_check
      _
    $region10: #{can_res_block_forward.1} parent=5 // pred_check_branch
      %204 = sbr.rel (%p201) target = $region12
    $region11: #{can_res_block_forward.1} parent=5 // pred_region
      %s205 = ssub.s32 %s20, 1
      // Predicated region
      $region13: #{can_res_block_forward.1} parent=11 // pred_check
        %p206 = pneg %p135
      $region14: #{can_res_block_forward.1} parent=11 // pred_check_branch
        %208 = sbr.rel (%p206) target = $region16
      $region15: #{can_res_block_forward.1} parent=11 // pred_region
        _
      $region16: #{can_res_block_forward.1} parent=11 // pred_fallthru
        _
    $region12: #{can_res_block_forward.1} parent=5 // pred_fallthru
      _
    %p209 = scmp.lt.s32.totalorder %s20, 2
    // Predicated region
    $region17: #{can_res_block_forward.1} parent=5 // pred_check
      %p210 = pneg %p209
    $region18: #{can_res_block_forward.1} parent=5 // pred_check_branch
      %212 = sbr.rel (%p210) target = $region20
    $region19: #{can_res_block_forward.1} parent=5 // pred_region
      // Predicated region
      $region21: #{can_res_block_forward.1} parent=19 // pred_check
        %p213 = pneg %p54
      $region22: #{can_res_block_forward.1} parent=19 // pred_check_branch
        %215 = sbr.rel (%p213) target = $region24
      $region23: #{can_res_block_forward.1} parent=19 // pred_region
        %s216 = smul.u32 2, %s28
        %p217 = scmp.lt.s32.totalorder %s27, 1
        %s218 = scalar_select %p217, %s27, 1
        %p219 = scmp.lt.s32.totalorder %s216, 1
        %s220 = scalar_select %p219, %s216, 1
        %s221 = smul.addr %s218, 2
        %s222 = sadd.s32 %s220, %s221
        %s223 = scalar_lea.vmem %s1, %s222
        %s224 = smul.u32 2, %s28
      $region24: #{can_res_block_forward.1} parent=19 // pred_fallthru
        _
      // Predicated region
      $region25: #{can_res_block_forward.1} parent=19 // pred_check
        %p225 = pneg %p82
      $region26: #{can_res_block_forward.1} parent=19 // pred_check_branch
        %227 = sbr.rel (%p225) target = $region28
      $region27: #{can_res_block_forward.1} parent=19 // pred_region
        %s228 = smul.u32 2, %s28
        %p229 = scmp.lt.s32.totalorder %s27, 1
        %s230 = scalar_select %p229, %s27, 1
        %p231 = scmp.lt.s32.totalorder %s228, 1
        %s232 = scalar_select %p231, %s228, 1
        %s233 = smul.addr %s230, 10
        %s234 = sadd.s32 %s232, %s233
        %s235 = smul.addr %s234, 4
        %s236 = scalar_lea.vmem %s2, %s235
        %s237 = smul.u32 2, %s28
      $region28: #{can_res_block_forward.1} parent=19 // pred_fallthru
        _
      // Predicated region
      $region29: #{can_res_block_forward.1} parent=19 // pred_check
        %p238 = pneg %p108
      $region30: #{can_res_block_forward.1} parent=19 // pred_check_branch
        %240 = sbr.rel (%p238) target = $region32
      $region31: #{can_res_block_forward.1} parent=19 // pred_region
        %p241 = scmp.lt.s32.totalorder %s27, 1
        %s242 = scalar_select %p241, %s27, 1
        %s243 = smul.addr %s242, 4
        %s244 = smul.addr %s243, 2
        %s245 = scalar_lea.vmem %s3, %s244
      $region32: #{can_res_block_forward.1} parent=19 // pred_fallthru
        _
      // Predicated region
      $region33: #{can_res_block_forward.1} parent=19 // pred_check
        %p246 = pneg %p157
      $region34: #{can_res_block_forward.1} parent=19 // pred_check_branch
        %248 = sbr.rel (%p246) target = $region36
      $region35: #{can_res_block_forward.1} parent=19 // pred_region
        %s249 = smul.u32 2, %s28
        %p250 = scmp.lt.s32.totalorder %s27, 1
        %s251 = scalar_select %p250, %s27, 1
        %p252 = scmp.lt.s32.totalorder %s249, 1
        %s253 = scalar_select %p252, %s249, 1
        %s254 = smul.addr %s251, 2
        %s255 = sadd.s32 %s253, %s254
        %s256 = smul.addr %s255, 4
        %s257 = scalar_lea.vmem %s5, %s256
        %s258 = smul.u32 2, %s28
      $region36: #{can_res_block_forward.1} parent=19 // pred_fallthru
        _
    $region20: #{can_res_block_forward.1} parent=5 // pred_fallthru
      _
    %p259 = scmp.le.s32.totalorder 1, %s20
    %p260 = scmp.lt.s32.totalorder %s20, 3
    %p261 = pnand %p259, %p260
    %p262 = pneg %p261
    // Predicated region
    $region37: #{can_res_block_forward.1} parent=5 // pred_check
      _
    $region38: #{can_res_block_forward.1} parent=5 // pred_check_branch
      %264 = sbr.rel (%p261) target = $region40
    $region39: #{can_res_block_forward.1} parent=5 // pred_region
      %s265 = ssub.s32 %s20, 1
      %s266 = smul.u32 2, %s30
      %p267 = scmp.lt.s32.totalorder %s29, 1
      %s268 = scalar_select %p267, %s29, 1
      %p269 = scmp.lt.s32.totalorder %s266, 1
      %s270 = scalar_select %p269, %s266, 1
      %s271 = smul.addr %s268, 2
      %s272 = sadd.s32 %s270, %s271
      %s273 = scalar_lea.vmem %s1, %s272
      %p274 = pneg %p60
      %p275 = pneg %p57
      %s276 = smul.u32 2, %s30
      %p277 = scmp.lt.s32.totalorder %s29, 1
      %s278 = scalar_select %p277, %s29, 1
      %p279 = scmp.lt.s32.totalorder %s276, 1
      %s280 = scalar_select %p279, %s276, 1
      %s281 = smul.addr %s278, 10
      %s282 = sadd.s32 %s280, %s281
      %s283 = smul.addr %s282, 4
      %s284 = scalar_lea.vmem %s2, %s283
      %p285 = pneg %p88
      %p286 = pneg %p85
      %p287 = scmp.lt.s32.totalorder %s29, 1
      %s288 = scalar_select %p287, %s29, 1
      %s289 = smul.addr %s288, 4
      %s290 = smul.addr %s289, 2
      %s291 = scalar_lea.vmem %s3, %s290
      %p292 = pneg %p114
      %p293 = pneg %p111
      %p294 = pneg %p135
      %p295 = pneg %p132
      %s296 = smul.u32 2, %s30
      %p297 = scmp.lt.s32.totalorder %s29, 1
      %s298 = scalar_select %p297, %s29, 1
      %p299 = scmp.lt.s32.totalorder %s296, 1
      %s300 = scalar_select %p299, %s296, 1
      %s301 = smul.addr %s298, 2
      %s302 = sadd.s32 %s300, %s301
      %s303 = smul.addr %s302, 4
      %s304 = scalar_lea.vmem %s5, %s303
      %p305 = pneg %p163
      %p306 = pneg %p160
      %p307 = pneg %p191
      %p308 = pneg %p188
      %s309 = smul.u32 2, %s30
      %p310 = scmp.lt.s32.totalorder %s29, 1
      %s311 = scalar_select %p310, %s29, 1
      %p312 = scmp.lt.s32.totalorder %s309, 1
      %s313 = scalar_select %p312, %s309, 1
      %s314 = smul.addr %s311, 2
      %s315 = sadd.s32 %s313, %s314
      %s316 = smul.addr %s315, 4
      %s317 = scalar_lea.vmem %s6, %s316
      %s318 = smul.u32 2, %s30
      %p319 = scmp.lt.s32.totalorder %s29, 1
      %s320 = scalar_select %p319, %s29, 1
      %p321 = scmp.lt.s32.totalorder %s318, 1
      %s322 = scalar_select %p321, %s318, 1
      %s323 = smul.addr %s320, 2
      %s324 = sadd.s32 %s322, %s323
      %s325 = scalar_lea.vmem %s1, %s324
      %s326 = smul.u32 2, %s30
      %s327 = smul.u32 2, %s30
      %p328 = scmp.lt.s32.totalorder %s29, 1
      %s329 = scalar_select %p328, %s29, 1
      %p330 = scmp.lt.s32.totalorder %s327, 1
      %s331 = scalar_select %p330, %s327, 1
      %s332 = smul.addr %s329, 10
      %s333 = sadd.s32 %s331, %s332
      %s334 = smul.addr %s333, 4
      %s335 = scalar_lea.vmem %s2, %s334
      %s336 = smul.u32 2, %s30
      %p337 = scmp.lt.s32.totalorder %s29, 1
      %s338 = scalar_select %p337, %s29, 1
      %s339 = smul.addr %s338, 4
      %s340 = smul.addr %s339, 2
      %s341 = scalar_lea.vmem %s3, %s340
      %s342 = smul.u32 2, %s30
      %p343 = scmp.lt.s32.totalorder %s29, 1
      %s344 = scalar_select %p343, %s29, 1
      %p345 = scmp.lt.s32.totalorder %s342, 1
      %s346 = scalar_select %p345, %s342, 1
      %s347 = smul.addr %s344, 2
      %s348 = sadd.s32 %s346, %s347
      %s349 = smul.addr %s348, 4
      %s350 = scalar_lea.vmem %s5, %s349
      %s351 = smul.u32 2, %s30
      %s352 = smul.u32 2, %s30
      %p353 = scmp.lt.s32.totalorder %s29, 1
      %s354 = scalar_select %p353, %s29, 1
      %p355 = scmp.lt.s32.totalorder %s352, 1
      %s356 = scalar_select %p355, %s352, 1
      %s357 = smul.addr %s354, 2
      %s358 = sadd.s32 %s356, %s357
      %s359 = smul.addr %s358, 4
      %s360 = scalar_lea.vmem %s6, %s359
      %s361 = smul.u32 2, %s30
      %s363 = sadd.s32 %s29, %s30
      %s364 = smul.u32 %s363, 4
      %v365 = vld [vmem:[%s325] sm:$0x3]
      %v366 = vld [vmem:[%s335] sm:$0xff]
      %v367 = vld [vmem:[%s335 + $0x8] sm:$0xff]
      %v368 = vld [vmem:[%s335 + $0x10] sm:$0xff]
      %v369 = vld [vmem:[%s335 + $0x18] sm:$0xff]
      %v370 = vld [vmem:[%s335 + $0x20] sm:$0xff]
      %371 = vst [vmem:[#allocation2] sm:$0xff] 0.0
      %s372 = sld [smem:[#allocation4 + %s364]]
      %p373 = scmp.gt.s32.totalorder %s372, 0
      // Predicated region
      $region41: #{can_res_block_forward.1} parent=39 // pred_check
        %p374 = pneg %p373
      $region42: #{can_res_block_forward.1} parent=39 // pred_check_branch
        %376 = sbr.rel (%p374) target = $region44
      $region43: #{can_res_block_forward.1} parent=39 // pred_region
        %v377 = vld [vmem:[%s341] sm:$0x3]
        %v383 = vunpack.c.l.b16 %v366
        %v384 = vunpack.c.h.b16 %v366
        %v385 = vunpack.c.l.b16 %v367
        %v386 = vunpack.c.h.b16 %v367
        %v387 = vunpack.c.l.b16 %v368
        %v388 = vunpack.c.h.b16 %v368
        %v389 = vunpack.c.l.b16 %v369
        %v390 = vunpack.c.h.b16 %v369
        %v391 = vunpack.c.l.b16 %v370
        %v392 = vunpack.c.h.b16 %v370
        %v393 = vpack.c.b16 %v385, %v383
        %v394 = vpack.c.b16 %v386, %v384
        %v395 = vpack.c.b16 %v389, %v387
        %v396 = vpack.c.b16 %v390, %v388
        %v397 = vpack.c.b16 %v391, %v391
        %v398 = vpack.c.b16 %v392, %v392
        %vm403 = vcmask 326656
        %v405 = vsel %vm403, %v377, 0
        %vm407 = vcmask 1043456
        %v409 = vsel %vm407, %v397, 0
        %v412 = vsel %vm407, %v398, 0
        %414 = vmatpush.bf16.msra.mxu0 0
        %415 = vmatpush.bf16.msra.mxu0 0
        %416 = vmatpush.bf16.msra.mxu0 0
        %417 = vmatpush.bf16.msra.mxu0 0
        %418 = vmatpush.bf16.msra.mxu0 0
        %419 = vmatpush.bf16.msra.mxu0 %v409
        %420 = vmatpush.bf16.msra.mxu0 %v395
        %421 = vmatpush.bf16.msra.mxu0 %v393
        %422 = vmatmul.bf16.gmra.mxu0 %v405
        %v423 = vpop.f32.mrf.mxu0
        %v424 = vadd.f32 0.0, %v423
        %v425 = vpop.f32.mrf.mxu0
        %426 = vdwg.mxu0
        %427 = vmatpush.bf16.msra.mxu0 0
        %428 = vmatpush.bf16.msra.mxu0 0
        %429 = vmatpush.bf16.msra.mxu0 0
        %430 = vmatpush.bf16.msra.mxu0 0
        %431 = vmatpush.bf16.msra.mxu0 0
        %432 = vmatpush.bf16.msra.mxu0 %v412
        %433 = vmatpush.bf16.msra.mxu0 %v396
        %434 = vmatpush.bf16.msra.mxu0 %v394
        %435 = vmatmul.bf16.gmra.mxu0 %v405
        %v436 = vpop.f32.mrf.mxu0
        %v437 = vadd.f32 0.0, %v436
        %v438 = vpop.f32.mrf.mxu0
        %439 = vdwg.mxu0
        %vm440 = vcmp.eq.s32.totalorder %v365, 0
        %v441 = vld [vmem:[#allocation2] sm:$0xff]
        %v442 = vsel %vm440, 1, 0
        %v443 = vperm.slane %v442, 0
        %v444 = vperm.slane %v442, 1
        %vm445 = vcmp.eq.s32.totalorder %v443, 1
        %vm446 = vcmp.eq.s32.totalorder %v444, 1
        %448 = vst [vmem:[#allocation1] ss:$2 sm:$0xff] %v441
        %v449 = vld.sshfl [vmem:[#allocation1] sm:$0xff pattern:$0x75316420]
        %v450 = vld.sshfl [vmem:[#allocation1 + $0x8] sm:$0xff pattern:$0x75316420]
        %v453 = vsel %vm445, %v424, %v449
        %v454 = vsel %vm446, %v437, %v450
        %v457 = vrot.slane %v454, 4
        %v458 = vsel %vm407, %v453, %v457
        %460 = vst [vmem:[#allocation2] sm:$0xff] %v458
      $region44: #{can_res_block_forward.1} parent=39 // pred_fallthru
        _
      %s461 = sadd.s32 %s364, 1
      %s462 = sld [smem:[#allocation4 + %s461]]
      %p463 = scmp.gt.s32.totalorder %s462, 0
      // Predicated region
      $region45: #{can_res_block_forward.1} parent=39 // pred_check
        %p464 = pneg %p463
      $region46: #{can_res_block_forward.1} parent=39 // pred_check_branch
        %466 = sbr.rel (%p464) target = $region48
      $region47: #{can_res_block_forward.1} parent=39 // pred_region
        %s467 = scalar_lea.vmem %s341, 2
        %v468 = vld [vmem:[%s467] sm:$0x3]
        %v474 = vunpack.c.l.b16 %v366
        %v475 = vunpack.c.h.b16 %v366
        %v476 = vunpack.c.l.b16 %v367
        %v477 = vunpack.c.h.b16 %v367
        %v478 = vunpack.c.l.b16 %v368
        %v479 = vunpack.c.h.b16 %v368
        %v480 = vunpack.c.l.b16 %v369
        %v481 = vunpack.c.h.b16 %v369
        %v482 = vunpack.c.l.b16 %v370
        %v483 = vunpack.c.h.b16 %v370
        %v484 = vpack.c.b16 %v476, %v474
        %v485 = vpack.c.b16 %v477, %v475
        %v486 = vpack.c.b16 %v480, %v478
        %v487 = vpack.c.b16 %v481, %v479
        %v488 = vpack.c.b16 %v482, %v482
        %v489 = vpack.c.b16 %v483, %v483
        %vm494 = vcmask 326656
        %v496 = vsel %vm494, %v468, 0
        %vm498 = vcmask 1043456
        %v500 = vsel %vm498, %v488, 0
        %v503 = vsel %vm498, %v489, 0
        %505 = vmatpush.bf16.msra.mxu0 0
        %506 = vmatpush.bf16.msra.mxu0 0
        %507 = vmatpush.bf16.msra.mxu0 0
        %508 = vmatpush.bf16.msra.mxu0 0
        %509 = vmatpush.bf16.msra.mxu0 0
        %510 = vmatpush.bf16.msra.mxu0 %v500
        %511 = vmatpush.bf16.msra.mxu0 %v486
        %512 = vmatpush.bf16.msra.mxu0 %v484
        %513 = vmatmul.bf16.gmra.mxu0 %v496
        %v514 = vpop.f32.mrf.mxu0
        %v515 = vadd.f32 0.0, %v514
        %v516 = vpop.f32.mrf.mxu0
        %517 = vdwg.mxu0
        %518 = vmatpush.bf16.msra.mxu0 0
        %519 = vmatpush.bf16.msra.mxu0 0
        %520 = vmatpush.bf16.msra.mxu0 0
        %521 = vmatpush.bf16.msra.mxu0 0
        %522 = vmatpush.bf16.msra.mxu0 0
        %523 = vmatpush.bf16.msra.mxu0 %v503
        %524 = vmatpush.bf16.msra.mxu0 %v487
        %525 = vmatpush.bf16.msra.mxu0 %v485
        %526 = vmatmul.bf16.gmra.mxu0 %v496
        %v527 = vpop.f32.mrf.mxu0
        %v528 = vadd.f32 0.0, %v527
        %v529 = vpop.f32.mrf.mxu0
        %530 = vdwg.mxu0
        %vm531 = vcmp.eq.s32.totalorder %v365, 1
        %v532 = vld [vmem:[#allocation2] sm:$0xff]
        %v533 = vsel %vm531, 1, 0
        %v534 = vperm.slane %v533, 0
        %v535 = vperm.slane %v533, 1
        %vm536 = vcmp.eq.s32.totalorder %v534, 1
        %vm537 = vcmp.eq.s32.totalorder %v535, 1
        %539 = vst [vmem:[#allocation1] ss:$2 sm:$0xff] %v532
        %v540 = vld.sshfl [vmem:[#allocation1] sm:$0xff pattern:$0x75316420]
        %v541 = vld.sshfl [vmem:[#allocation1 + $0x8] sm:$0xff pattern:$0x75316420]
        %v544 = vsel %vm536, %v515, %v540
        %v545 = vsel %vm537, %v528, %v541
        %v548 = vrot.slane %v545, 4
        %v549 = vsel %vm498, %v544, %v548
        %551 = vst [vmem:[#allocation2] sm:$0xff] %v549
      $region48: #{can_res_block_forward.1} parent=39 // pred_fallthru
        _
      %s552 = sadd.s32 %s364, 2
      %s553 = sld [smem:[#allocation4 + %s552]]
      %p554 = scmp.gt.s32.totalorder %s553, 0
      // Predicated region
      $region49: #{can_res_block_forward.1} parent=39 // pred_check
        %p555 = pneg %p554
      $region50: #{can_res_block_forward.1} parent=39 // pred_check_branch
        %557 = sbr.rel (%p555) target = $region52
      $region51: #{can_res_block_forward.1} parent=39 // pred_region
        %s558 = scalar_lea.vmem %s341, 4
        %v559 = vld [vmem:[%s558] sm:$0x3]
        %v565 = vunpack.c.l.b16 %v366
        %v566 = vunpack.c.h.b16 %v366
        %v567 = vunpack.c.l.b16 %v367
        %v568 = vunpack.c.h.b16 %v367
        %v569 = vunpack.c.l.b16 %v368
        %v570 = vunpack.c.h.b16 %v368
        %v571 = vunpack.c.l.b16 %v369
        %v572 = vunpack.c.h.b16 %v369
        %v573 = vunpack.c.l.b16 %v370
        %v574 = vunpack.c.h.b16 %v370
        %v575 = vpack.c.b16 %v567, %v565
        %v576 = vpack.c.b16 %v568, %v566
        %v577 = vpack.c.b16 %v571, %v569
        %v578 = vpack.c.b16 %v572, %v570
        %v579 = vpack.c.b16 %v573, %v573
        %v580 = vpack.c.b16 %v574, %v574
        %vm585 = vcmask 326656
        %v587 = vsel %vm585, %v559, 0
        %vm589 = vcmask 1043456
        %v591 = vsel %vm589, %v579, 0
        %v594 = vsel %vm589, %v580, 0
        %596 = vmatpush.bf16.msra.mxu0 0
        %597 = vmatpush.bf16.msra.mxu0 0
        %598 = vmatpush.bf16.msra.mxu0 0
        %599 = vmatpush.bf16.msra.mxu0 0
        %600 = vmatpush.bf16.msra.mxu0 0
        %601 = vmatpush.bf16.msra.mxu0 %v591
        %602 = vmatpush.bf16.msra.mxu0 %v577
        %603 = vmatpush.bf16.msra.mxu0 %v575
        %604 = vmatmul.bf16.gmra.mxu0 %v587
        %v605 = vpop.f32.mrf.mxu0
        %v606 = vadd.f32 0.0, %v605
        %v607 = vpop.f32.mrf.mxu0
        %608 = vdwg.mxu0
        %609 = vmatpush.bf16.msra.mxu0 0
        %610 = vmatpush.bf16.msra.mxu0 0
        %611 = vmatpush.bf16.msra.mxu0 0
        %612 = vmatpush.bf16.msra.mxu0 0
        %613 = vmatpush.bf16.msra.mxu0 0
        %614 = vmatpush.bf16.msra.mxu0 %v594
        %615 = vmatpush.bf16.msra.mxu0 %v578
        %616 = vmatpush.bf16.msra.mxu0 %v576
        %617 = vmatmul.bf16.gmra.mxu0 %v587
        %v618 = vpop.f32.mrf.mxu0
        %v619 = vadd.f32 0.0, %v618
        %v620 = vpop.f32.mrf.mxu0
        %621 = vdwg.mxu0
        %vm622 = vcmp.eq.s32.totalorder %v365, 2
        %v623 = vld [vmem:[#allocation2] sm:$0xff]
        %v624 = vsel %vm622, 1, 0
        %v625 = vperm.slane %v624, 0
        %v626 = vperm.slane %v624, 1
        %vm627 = vcmp.eq.s32.totalorder %v625, 1
        %vm628 = vcmp.eq.s32.totalorder %v626, 1
        %630 = vst [vmem:[#allocation1] ss:$2 sm:$0xff] %v623
        %v631 = vld.sshfl [vmem:[#allocation1] sm:$0xff pattern:$0x75316420]
        %v632 = vld.sshfl [vmem:[#allocation1 + $0x8] sm:$0xff pattern:$0x75316420]
        %v635 = vsel %vm627, %v606, %v631
        %v636 = vsel %vm628, %v619, %v632
        %v639 = vrot.slane %v636, 4
        %v640 = vsel %vm589, %v635, %v639
        %642 = vst [vmem:[#allocation2] sm:$0xff] %v640
      $region52: #{can_res_block_forward.1} parent=39 // pred_fallthru
        _
      %s643 = sadd.s32 %s364, 3
      %s644 = sld [smem:[#allocation4 + %s643]]
      %p645 = scmp.gt.s32.totalorder %s644, 0
      // Predicated region
      $region53: #{can_res_block_forward.1} parent=39 // pred_check
        %p646 = pneg %p645
      $region54: #{can_res_block_forward.1} parent=39 // pred_check_branch
        %648 = sbr.rel (%p646) target = $region56
      $region55: #{can_res_block_forward.1} parent=39 // pred_region
        %s649 = scalar_lea.vmem %s341, 6
        %v650 = vld [vmem:[%s649] sm:$0x3]
        %v656 = vunpack.c.l.b16 %v366
        %v657 = vunpack.c.h.b16 %v366
        %v658 = vunpack.c.l.b16 %v367
        %v659 = vunpack.c.h.b16 %v367
        %v660 = vunpack.c.l.b16 %v368
        %v661 = vunpack.c.h.b16 %v368
        %v662 = vunpack.c.l.b16 %v369
        %v663 = vunpack.c.h.b16 %v369
        %v664 = vunpack.c.l.b16 %v370
        %v665 = vunpack.c.h.b16 %v370
        %v666 = vpack.c.b16 %v658, %v656
        %v667 = vpack.c.b16 %v659, %v657
        %v668 = vpack.c.b16 %v662, %v660
        %v669 = vpack.c.b16 %v663, %v661
        %v670 = vpack.c.b16 %v664, %v664
        %v671 = vpack.c.b16 %v665, %v665
        %vm676 = vcmask 326656
        %v678 = vsel %vm676, %v650, 0
        %vm680 = vcmask 1043456
        %v682 = vsel %vm680, %v670, 0
        %v685 = vsel %vm680, %v671, 0
        %687 = vmatpush.bf16.msra.mxu0 0
        %688 = vmatpush.bf16.msra.mxu0 0
        %689 = vmatpush.bf16.msra.mxu0 0
        %690 = vmatpush.bf16.msra.mxu0 0
        %691 = vmatpush.bf16.msra.mxu0 0
        %692 = vmatpush.bf16.msra.mxu0 %v682
        %693 = vmatpush.bf16.msra.mxu0 %v668
        %694 = vmatpush.bf16.msra.mxu0 %v666
        %695 = vmatmul.bf16.gmra.mxu0 %v678
        %v696 = vpop.f32.mrf.mxu0
        %v697 = vadd.f32 0.0, %v696
        %v698 = vpop.f32.mrf.mxu0
        %699 = vdwg.mxu0
        %700 = vmatpush.bf16.msra.mxu0 0
        %701 = vmatpush.bf16.msra.mxu0 0
        %702 = vmatpush.bf16.msra.mxu0 0
        %703 = vmatpush.bf16.msra.mxu0 0
        %704 = vmatpush.bf16.msra.mxu0 0
        %705 = vmatpush.bf16.msra.mxu0 %v685
        %706 = vmatpush.bf16.msra.mxu0 %v669
        %707 = vmatpush.bf16.msra.mxu0 %v667
        %708 = vmatmul.bf16.gmra.mxu0 %v678
        %v709 = vpop.f32.mrf.mxu0
        %v710 = vadd.f32 0.0, %v709
        %v711 = vpop.f32.mrf.mxu0
        %712 = vdwg.mxu0
        %vm713 = vcmp.eq.s32.totalorder %v365, 3
        %v714 = vld [vmem:[#allocation2] sm:$0xff]
        %v715 = vsel %vm713, 1, 0
        %v716 = vperm.slane %v715, 0
        %v717 = vperm.slane %v715, 1
        %vm718 = vcmp.eq.s32.totalorder %v716, 1
        %vm719 = vcmp.eq.s32.totalorder %v717, 1
        %721 = vst [vmem:[#allocation1] ss:$2 sm:$0xff] %v714
        %v722 = vld.sshfl [vmem:[#allocation1] sm:$0xff pattern:$0x75316420]
        %v723 = vld.sshfl [vmem:[#allocation1 + $0x8] sm:$0xff pattern:$0x75316420]
        %v726 = vsel %vm718, %v697, %v722
        %v727 = vsel %vm719, %v710, %v723
        %v730 = vrot.slane %v727, 4
        %v731 = vsel %vm680, %v726, %v730
        %733 = vst [vmem:[#allocation2] sm:$0xff] %v731
      $region56: #{can_res_block_forward.1} parent=39 // pred_fallthru
        _
      %v734 = vld [vmem:[#allocation2] sm:$0xff]
      %v735 = vld [vmem:[%s4] sm:$0xf]
      %737 = vset.pattern.permute.xlu0 0
      %738 = vperm.xlu0 %737, %v735
      %v739 = vpop.permute.xlu0 %738
      %v741 = vunpack.c.l.s4 839922192
      %v742 = vunpack.c.0.s8 %v741
      %v743 = vperm.slane %v739, %v742
      %v745 = vadd.f32 %v734, %v743
      %vm746 = vcmp.ge.f32.partialorder %v745, 0.0
      %v747 = vmul.f32 %v745, 0.01
      %v748 = vsel %vm746, %v745, %v747
      %v749 = vld [vmem:[%s350] sm:$0xff]
      %v750 = vadd.f32 %v749, %v748
      %751 = vst [vmem:[%s360] sm:$0xff] %v750
      %s752 = smul.u32 2, %s30
      %p753 = scmp.lt.s32.totalorder %s29, 1
      %s754 = scalar_select %p753, %s29, 1
      %p755 = scmp.lt.s32.totalorder %s752, 1
      %s756 = scalar_select %p755, %s752, 1
      %s757 = smul.addr %s754, 2
      %s758 = sadd.s32 %s756, %s757
      %s759 = smul.addr %s758, 4
      %s760 = scalar_lea.vmem %s6, %s759
      // Predicated region
      $region57: #{can_res_block_forward.1} parent=39 // pred_check
        %p761 = pneg %p188
      $region58: #{can_res_block_forward.1} parent=39 // pred_check_branch
        %763 = sbr.rel (%p761) target = $region60
      $region59: #{can_res_block_forward.1} parent=39 // pred_region
        %s764 = smul.u32 2, %s30
      $region60: #{can_res_block_forward.1} parent=39 // pred_fallthru
        _
    $region40: #{can_res_block_forward.1} parent=5 // pred_fallthru
      _
    %p765 = scmp.le.s32.totalorder 2, %s20
    // Predicated region
    $region61: #{can_res_block_forward.1} parent=5 // pred_check
      %p766 = pneg %p765
    $region62: #{can_res_block_forward.1} parent=5 // pred_check_branch
      %768 = sbr.rel (%p766) target = $region64
    $region63: #{can_res_block_forward.1} parent=5 // pred_region
      %s769 = ssub.s32 %s20, 2
      // Predicated region
      $region65: #{can_res_block_forward.1} parent=63 // pred_check
        %p770 = pneg %p194
      $region66: #{can_res_block_forward.1} parent=63 // pred_check_branch
        %772 = sbr.rel (%p770) target = $region68
      $region67: #{can_res_block_forward.1} parent=63 // pred_region
        %s773 = smul.u32 2, %s32
        %p774 = scmp.lt.s32.totalorder %s31, 1
        %s775 = scalar_select %p774, %s31, 1
        %p776 = scmp.lt.s32.totalorder %s773, 1
        %s777 = scalar_select %p776, %s773, 1
        %s778 = smul.addr %s775, 2
        %s779 = sadd.s32 %s777, %s778
        %s780 = smul.addr %s779, 4
        %s781 = scalar_lea.vmem %s6, %s780
      $region68: #{can_res_block_forward.1} parent=63 // pred_fallthru
        _
    $region64: #{can_res_block_forward.1} parent=5 // pred_fallthru
      _
  $region6: #{can_res_block_forward.1} parent=0 // loop_footer
    %s24 = sadd.s32 1, %s20
  $region7: #{can_res_block_forward.1} parent=0 // loop_footer_branch
    %19 = sbr.rel target = $region3
  $region8: #{can_res_block_forward.1} parent=0 // loop_exit
    _

</llo_original>
